<compile_context>
chip_gen: v6e
topology: v6e:2x2x1
jax: 0.10.0
libtpu: 0.0.40
codegen_flags: <defaults>
</compile_context>

<pallas_src>
import math

import jax
import jax.numpy as jnp
import numpy as np
from jax.experimental import pallas as pl
from jax.experimental.pallas import tpu as pltpu


def _cellconv_kernel(x_ref, wt_ref, b_ref, o_ref):
    # x_ref: (TM, r*Cin)  wt_ref: (r*Cin, r*Cout)  b_ref: (1, r*Cout)  o_ref: (TM, r*Cout)
    acc = jnp.dot(x_ref[...], wt_ref[...], preferred_element_type=jnp.float32)
    o_ref[...] = (acc + b_ref[...].astype(jnp.float32)).astype(o_ref.dtype)


def _round_up(x, m):
    return ((x + m - 1) // m) * m


def _fold_factor(c_in, c_out, itemsize, max_weight_bytes=4 << 20):
    """Smallest power-of-two r making r*Cin and r*Cout multiples of 128 (lane-dense),
    capped so the block-diagonal folded weight stays small."""
    need_in = 128 // math.gcd(128, c_in)
    need_out = 128 // math.gcd(128, c_out)
    r = max(need_in, need_out)          # both are powers of two -> lcm == max
    while r > 1 and (r * c_in) * (r * c_out) * itemsize > max_weight_bytes:
        r //= 2
    return r


def cell_conv(audio, weight, bias, *, target_step_bytes=4 << 20):
    """CellConv.forward: audio (..., Cin) -> (..., Cout) via nn.Linear(Cin, Cout).

    weight: (Cout, Cin) (PyTorch layout), bias: (Cout,).
    """
    *lead, c_in = audio.shape
    c_out = weight.shape[0]
    out_dtype = audio.dtype
    itemsize = jnp.dtype(out_dtype).itemsize

    x = audio.reshape(-1, c_in)
    m = x.shape[0]

    # ---- row-fold factor for lane density ----
    r = _fold_factor(c_in, c_out, itemsize)
    m_pad = _round_up(m, r)
    if m_pad != m:
        # Pad < r rows (zeros) just to legalize the fold reshape; padded rows only
        # ever receive the bias and are sliced off below.
        x = jnp.pad(x, ((0, m_pad - m), (0, 0)))
    mf = m_pad // r
    ci_f, co_f = r * c_in, r * c_out

    xf = x.reshape(mf, ci_f)            # free metadata reshape (row-major contiguous)

    # Folded parameters: block-diagonal weight (r copies of W^T), bias tiled r times.
    # Done once per call; under jit with a constant weight this hoists/folds.
    wt = jnp.transpose(weight).astype(out_dtype)            # (Cin, Cout)
    if r > 1:
        wf = jnp.kron(jnp.eye(r, dtype=out_dtype), wt)      # (r*Cin, r*Cout)
        bf = jnp.tile(bias.astype(jnp.float32), r).reshape(1, co_f)
    else:
        wf = wt
        bf = bias.astype(jnp.float32).reshape(1, co_f)

    # ---- M tile: MB-scale steps; keep >=2 grid steps when possible (v7x has 2 TCs) ----
    row_bytes = (ci_f + co_f) * itemsize
    tm = max(8, (target_step_bytes // row_bytes) // 8 * 8)
    if mf <= tm:
        if mf >= 16:
            tm = _round_up(pl.cdiv(mf, 2), 8)   # split into two steps for megacore
        else:
            tm = mf                             # tiny problem: one full-extent block
    grid_m = pl.cdiv(mf, tm)                    # ragged last block handled by Pallas

    # Explicit VMEM budget: 2 double-buffered (x + out) tiles + resident weight/bias.
    weight_bytes = ci_f * co_f * itemsize
    vmem_bytes = 2 * tm * row_bytes + weight_bytes + co_f * 4 + (2 << 20)
    vmem_bytes = int(min(max(vmem_bytes, 4 << 20), 48 << 20))

    out = pl.pallas_call(
        _cellconv_kernel,
        out_shape=jax.ShapeDtypeStruct((mf, co_f), out_dtype),
        grid=(grid_m,),
        in_specs=[
            pl.BlockSpec((tm, ci_f), lambda i: (i, 0)),
            pl.BlockSpec((ci_f, co_f), lambda i: (0, 0)),   # grid-invariant weight
            pl.BlockSpec((1, co_f), lambda i: (0, 0)),      # grid-invariant bias
        ],
        out_specs=pl.BlockSpec((tm, co_f), lambda i: (i, 0)),
        compiler_params=pltpu.CompilerParams(
            dimension_semantics=("parallel",),
            vmem_limit_bytes=vmem_bytes),
    )(xf, wf, bf)

    out = out.reshape(m_pad, c_out)             # free metadata reshape back
    if m_pad != m:
        out = out[:m]
    return out.reshape(*lead, c_out)


def reference(audio, weight, bias):
    """Plain-JAX reference mirroring nn.Linear(in_channels, out_channels)."""
    return jnp.einsum('...i,oi->...o', audio, weight) + bias


def init_params(key, in_channels, out_channels):
    """nn.Linear default init: U(-1/sqrt(fan_in), 1/sqrt(fan_in)) for weight and bias."""
    kw, kb = jax.random.split(key)
    bound = 1.0 / math.sqrt(in_channels)
    weight = jax.random.uniform(kw, (out_channels, in_channels), jnp.float32,
                                -bound, bound)
    bias = jax.random.uniform(kb, (out_channels,), jnp.float32, -bound, bound)
    return weight, bias


if __name__ == "__main__":
    key = jax.random.PRNGKey(0)
    k_par, k_x, k_x2 = jax.random.split(key, 3)

    # Small shapes consistent with the module: channel-last sequence input.
    B, L, C_IN, C_OUT = 2, 16, 4, 32
    weight, bias = init_params(k_par, C_IN, C_OUT)
    audio = jax.random.normal(k_x, (B, L, C_IN), jnp.float32)

    cc = jax.jit(cell_conv)

    out = jax.block_until_ready(cc(audio, weight, bias))
    ref = reference(audio, weight, bias)
    np.testing.assert_allclose(np.asarray(out), np.asarray(ref), rtol=1e-5, atol=1e-5)

    # Second check: longer (non-multiple) sequence -> exercises the sub-r pad,
    # multi-step grid and the ragged last block.
    audio2 = jax.random.normal(k_x2, (2, 1500, C_IN), jnp.float32)
    out2 = jax.block_until_ready(cc(audio2, weight, bias))
    ref2 = reference(audio2, weight, bias)
    np.testing.assert_allclose(np.asarray(out2), np.asarray(ref2), rtol=1e-5, atol=1e-5)

    print("KERNEL_OK")
</pallas_src>

<mosaic_0001>
module attributes {stable_mosaic.version = 11 : i64} {
  func.func @_cellconv_kernel(%arg0: i32, %arg1: memref<1x128xf32, #tpu.memory_space<vmem>>, %arg2: memref<128x1024xf32, #tpu.memory_space<vmem>>, %arg3: memref<1x1024xf32, #tpu.memory_space<vmem>>, %arg4: memref<1x1024xf32, #tpu.memory_space<vmem>>) attributes {dimension_semantics = [#tpu.dimension_semantics<parallel>], iteration_bounds = array<i64: 1>, scalar_prefetch = 0 : i64, scratch_operands = 0 : i64, tpu.core_type = #tpu.core_type<tc>, window_params = [{transform_indices = @transform_0, window_bounds = array<i64: 1, 128>}, {pipeline_mode = #tpu.pipeline_mode<synchronous>, transform_indices = @transform_1, window_bounds = array<i64: 128, 1024>}, {pipeline_mode = #tpu.pipeline_mode<synchronous>, transform_indices = @transform_2, window_bounds = array<i64: 1, 1024>}, {transform_indices = @transform_3, window_bounds = array<i64: 1, 1024>}]} {
    %c0 = arith.constant 0 : index
    %c0_0 = arith.constant 0 : index
    %0 = vector.load %arg1[%c0, %c0_0] : memref<1x128xf32, #tpu.memory_space<vmem>>, vector<1x128xf32>
    %c0_1 = arith.constant 0 : index
    %c0_2 = arith.constant 0 : index
    %1 = vector.load %arg2[%c0_1, %c0_2] : memref<128x1024xf32, #tpu.memory_space<vmem>>, vector<128x1024xf32>
    %cst = arith.constant dense<0.000000e+00> : vector<1x1024xf32>
    %2 = tpu.matmul %0, %1, %cst {dimension_numbers = #tpu.dot_dimension_numbers<[1], [0], [0], [1], [0, 0, 1, 1], [], []>} : vector<1x128xf32>, vector<128x1024xf32>, vector<1x1024xf32> -> vector<1x1024xf32>
    %c0_3 = arith.constant 0 : index
    %c0_4 = arith.constant 0 : index
    %3 = vector.load %arg3[%c0_3, %c0_4] : memref<1x1024xf32, #tpu.memory_space<vmem>>, vector<1x1024xf32>
    %4 = arith.addf %2, %3 : vector<1x1024xf32>
    %c0_5 = arith.constant 0 : index
    %c0_6 = arith.constant 0 : index
    %5 = vector.load %arg4[%c0_5, %c0_6] : memref<1x1024xf32, #tpu.memory_space<vmem>>, vector<1x1024xf32>
    tpu.vector_store %arg4[%c0_5, %c0_6], %4 {strides = array<i32>} : memref<1x1024xf32, #tpu.memory_space<vmem>>, vector<1x1024xf32>,
    return
  }
  func.func @transform_0(%arg0: i32) -> (i32, i32) {
    %c0_i32 = arith.constant 0 : i32
    %c0_i32_0 = arith.constant 0 : i32
    return %arg0, %c0_i32 : i32, i32
  }
  func.func @transform_1(%arg0: i32) -> (i32, i32) {
    %c0_i32 = arith.constant 0 : i32
    %c0_i32_0 = arith.constant 0 : i32
    %c0_i32_1 = arith.constant 0 : i32
    return %c0_i32, %c0_i32_0 : i32, i32
  }
  func.func @transform_2(%arg0: i32) -> (i32, i32) {
    %c0_i32 = arith.constant 0 : i32
    %c0_i32_0 = arith.constant 0 : i32
    %c0_i32_1 = arith.constant 0 : i32
    return %c0_i32, %c0_i32_0 : i32, i32
  }
  func.func @transform_3(%arg0: i32) -> (i32, i32) {
    %c0_i32 = arith.constant 0 : i32
    %c0_i32_0 = arith.constant 0 : i32
    return %arg0, %c0_i32 : i32, i32
  }
}

</mosaic_0001>

<llo_original>
// kernel: tile.8
$region0: #{tile.8}
  #allocation0 [shape = 's32[1]{0}', space=sflag, size = 0x4, scoped, tag = 'scoped memory for tile.8']
  %s0 = inlined_call_operand.vmem [shape: f32[32], index: 0, kind: input, shape index: {}]
  %s1 = inlined_call_operand.vmem [shape: f32[32,32], index: 1, kind: output, shape index: {}]
  // Predicated region
  $region2: #{tile.8} parent=0 // pred_check
    _
  $region3: #{tile.8} parent=0 // pred_check_branch
    %3 = sbr.rel (0) target = $region5
  $region4: #{tile.8} parent=0 // pred_region
    _
  $region5: #{tile.8} parent=0 // pred_fallthru
    _
  %v4 = vld [vmem:[%s0] ss:$0 sm:$0xff]
  %5 = vst [vmem:[%s1] sm:$0xff] %v4
  %s6 = scalar_lea.vmem %s1, 8
  %7 = vst [vmem:[%s6] sm:$0xff] %v4
  %s8 = scalar_lea.vmem %s1, 16
  %9 = vst [vmem:[%s8] sm:$0xff] %v4
  %s10 = scalar_lea.vmem %s1, 24
  %11 = vst [vmem:[%s10] sm:$0xff] %v4

// kernel: tile.9
$region0: #{tile.9}
  %s0 = inlined_call_operand.vmem [shape: f32[32,32], index: 0, kind: input, shape index: {}]
  %s1 = inlined_call_operand.vmem [shape: f32[1,1024], index: 1, kind: output, shape index: {}]
  $region1: #{tile.9} parent=0
    #allocation0 [shape = 'u8[32768]{0}', space=vmem, size = 0x8000, scoped, tag = 'scoped mem for output reshape']
    %v2 = vld [vmem:[%s0] ss:$4 sm:$0xff]
    %vm3 = vcmask 261120
    %4 = vst.msk [vmem:[#allocation0] ss:$8 sm:$0xf] %vm3, %v2
    %5 = vst.msk [vmem:[#allocation0] ss:$8 sm:$0xf0] %vm3, %v2
    %s6 = scalar_lea.vmem %s0, 3
    %v7 = vld [vmem:[%s6] ss:$4 sm:$0xff]
    %8 = vrot.lane.b32.xlu0 %v7, 96
    %v9 = vpop.permute.xlu0 %8
    %vm10 = vcmask 1048320
    %11 = vst.msk [vmem:[#allocation0] ss:$8 sm:$0xf] %vm10, %v9
    %12 = vst.msk [vmem:[#allocation0] ss:$8 sm:$0xf0] %vm10, %v9
    %s13 = scalar_lea.vmem %s0, 2
    %v14 = vld [vmem:[%s13] ss:$4 sm:$0xff]
    %15 = vrot.lane.b32.xlu0 %v14, 64
    %v16 = vpop.permute.xlu0 %15
    %vm17 = vcmask 785920
    %18 = vst.msk [vmem:[#allocation0] ss:$8 sm:$0xf] %vm17, %v16
    %19 = vst.msk [vmem:[#allocation0] ss:$8 sm:$0xf0] %vm17, %v16
    %s20 = scalar_lea.vmem %s0, 1
    %v21 = vld [vmem:[%s20] ss:$4 sm:$0xff]
    %22 = vrot.lane.b32.xlu0 %v21, 32
    %v23 = vpop.permute.xlu0 %22
    %vm24 = vcmask 523520
    %25 = vst.msk [vmem:[#allocation0] ss:$8 sm:$0xf] %vm24, %v23
    %26 = vst.msk [vmem:[#allocation0] ss:$8 sm:$0xf0] %vm24, %v23
    %s28 = sshll.u32 1, 1
    %s29 = ssub.s32 %s28, 1
    %v31 = vld [vmem:[#allocation0] sm:%s29]
    %s32 = sshll.u32 1, 1
    %s33 = ssub.s32 %s32, 1
    %34 = vst [vmem:[%s1] sm:%s33] %v31
    %s35 = scalar_lea.vmem [#allocation0], 8
    %v36 = vld [vmem:[%s35] sm:%s29]
    %s37 = sshll.u32 1, 1
    %s38 = ssub.s32 %s37, 1
    %s39 = scalar_lea.vmem %s1, 1
    %40 = vst [vmem:[%s39] sm:%s38] %v36
    %s41 = scalar_lea.vmem [#allocation0], 16
    %v42 = vld [vmem:[%s41] sm:%s29]
    %s43 = sshll.u32 1, 1
    %s44 = ssub.s32 %s43, 1
    %s45 = smul.addr 1, 2
    %s46 = scalar_lea.vmem %s1, %s45
    %47 = vst [vmem:[%s46] sm:%s44] %v42
    %s48 = scalar_lea.vmem [#allocation0], 24
    %v49 = vld [vmem:[%s48] sm:%s29]
    %s50 = sshll.u32 1, 1
    %s51 = ssub.s32 %s50, 1
    %s52 = smul.addr 1, 3
    %s53 = scalar_lea.vmem %s1, %s52
    %54 = vst [vmem:[%s53] sm:%s51] %v49
    %s55 = scalar_lea.vmem [#allocation0], 32
    %v56 = vld [vmem:[%s55] sm:%s29]
    %s57 = sshll.u32 1, 1
    %s58 = ssub.s32 %s57, 1
    %s59 = smul.addr 1, 4
    %s60 = scalar_lea.vmem %s1, %s59
    %61 = vst [vmem:[%s60] sm:%s58] %v56
    %s62 = scalar_lea.vmem [#allocation0], 40
    %v63 = vld [vmem:[%s62] sm:%s29]
    %s64 = sshll.u32 1, 1
    %s65 = ssub.s32 %s64, 1
    %s66 = smul.addr 1, 5
    %s67 = scalar_lea.vmem %s1, %s66
    %68 = vst [vmem:[%s67] sm:%s65] %v63
    %s69 = scalar_lea.vmem [#allocation0], 48
    %v70 = vld [vmem:[%s69] sm:%s29]
    %s71 = sshll.u32 1, 1
    %s72 = ssub.s32 %s71, 1
    %s73 = smul.addr 1, 6
    %s74 = scalar_lea.vmem %s1, %s73
    %75 = vst [vmem:[%s74] sm:%s72] %v70
    %s76 = scalar_lea.vmem [#allocation0], 56
    %v77 = vld [vmem:[%s76] sm:%s29]
    %s78 = sshll.u32 1, 1
    %s79 = ssub.s32 %s78, 1
    %s80 = smul.addr 1, 7
    %s81 = scalar_lea.vmem %s1, %s80
    %82 = vst [vmem:[%s81] sm:%s79] %v77

// kernel: cell_conv.1
$region0: #{cell_conv.1}
  #allocation0 [shape = 'u32[]', space=smem, size = 0x4, offset = 0x4, fixed_abs, tag = 'smem constant byte address 0x4 - core index']
  #allocation1 [shape = 'u32[144,128]{1,0:T(1,128)}', space=vmem, size = 0x12000, scoped, tag = 'internal scratch']
  %s0 = inlined_call_operand.vmem [shape: f32[1,128], index: 0, kind: input, shape index: {}]
  %s1 = inlined_call_operand.vmem [shape: f32[128,1024], index: 1, kind: input, shape index: {}]
  %s2 = inlined_call_operand.vmem [shape: f32[1,1024], index: 2, kind: input, shape index: {}]
  %s3 = inlined_call_operand.vmem [shape: f32[1,1024], index: 3, kind: output, shape index: {}]
  %s4 = sld [smem:[#allocation0]]
  $region22: #{cell_conv.1} parent=0
    _
  %s6 = ssub.s32 1, %s4
  %s7 = scalar_select 0, %s6, %s4
  // Predicated region
  $region2: #{cell_conv.1} parent=0 // pred_check
    _
  $region3: #{cell_conv.1} parent=0 // pred_check_branch
    %9 = sbr.rel (0) target = $region5
  $region4: #{cell_conv.1} parent=0 // pred_region
    _
  $region5: #{cell_conv.1} parent=0 // pred_fallthru
    _
  // Predicated region
  $region6: #{cell_conv.1} parent=0 // pred_check
    _
  $region7: #{cell_conv.1} parent=0 // pred_check_branch
    %11 = sbr.rel (0) target = $region9
  $region8: #{cell_conv.1} parent=0 // pred_region
    _
  $region9: #{cell_conv.1} parent=0 // pred_fallthru
    _
  // Predicated region
  $region10: #{cell_conv.1} parent=0 // pred_check
    _
  $region11: #{cell_conv.1} parent=0 // pred_check_branch
    %13 = sbr.rel (0) target = $region13
  $region12: #{cell_conv.1} parent=0 // pred_region
    _
  $region13: #{cell_conv.1} parent=0 // pred_fallthru
    _
  %v14 = vld [vmem:[%s0] sm:$0x1]
  %v15 = vld [vmem:[%s1] sm:$0xff]
  %v16 = vld [vmem:[%s1 + $0x8] sm:$0xff]
  %v17 = vld [vmem:[%s1 + $0x10] sm:$0xff]
  %v18 = vld [vmem:[%s1 + $0x18] sm:$0xff]
  %v19 = vld [vmem:[%s1 + $0x20] sm:$0xff]
  %v20 = vld [vmem:[%s1 + $0x28] sm:$0xff]
  %v21 = vld [vmem:[%s1 + $0x30] sm:$0xff]
  %v22 = vld [vmem:[%s1 + $0x38] sm:$0xff]
  %v23 = vld [vmem:[%s1 + $0x40] sm:$0xff]
  %v24 = vld [vmem:[%s1 + $0x48] sm:$0xff]
  %v25 = vld [vmem:[%s1 + $0x50] sm:$0xff]
  %v26 = vld [vmem:[%s1 + $0x58] sm:$0xff]
  %v27 = vld [vmem:[%s1 + $0x60] sm:$0xff]
  %v28 = vld [vmem:[%s1 + $0x68] sm:$0xff]
  %v29 = vld [vmem:[%s1 + $0x70] sm:$0xff]
  %v30 = vld [vmem:[%s1 + $0x78] sm:$0xff]
  %v31 = vld [vmem:[%s1 + $0x80] sm:$0xff]
  %v32 = vld [vmem:[%s1 + $0x88] sm:$0xff]
  %v33 = vld [vmem:[%s1 + $0x90] sm:$0xff]
  %v34 = vld [vmem:[%s1 + $0x98] sm:$0xff]
  %v35 = vld [vmem:[%s1 + $0xa0] sm:$0xff]
  %v36 = vld [vmem:[%s1 + $0xa8] sm:$0xff]
  %v37 = vld [vmem:[%s1 + $0xb0] sm:$0xff]
  %v38 = vld [vmem:[%s1 + $0xb8] sm:$0xff]
  %v39 = vld [vmem:[%s1 + $0xc0] sm:$0xff]
  %v40 = vld [vmem:[%s1 + $0xc8] sm:$0xff]
  %v41 = vld [vmem:[%s1 + $0xd0] sm:$0xff]
  %v42 = vld [vmem:[%s1 + $0xd8] sm:$0xff]
  %v43 = vld [vmem:[%s1 + $0xe0] sm:$0xff]
  %v44 = vld [vmem:[%s1 + $0xe8] sm:$0xff]
  %v45 = vld [vmem:[%s1 + $0xf0] sm:$0xff]
  %v46 = vld [vmem:[%s1 + $0xf8] sm:$0xff]
  %v47 = vld [vmem:[%s1 + $0x100] sm:$0xff]
  %v48 = vld [vmem:[%s1 + $0x108] sm:$0xff]
  %v49 = vld [vmem:[%s1 + $0x110] sm:$0xff]
  %v50 = vld [vmem:[%s1 + $0x118] sm:$0xff]
  %v51 = vld [vmem:[%s1 + $0x120] sm:$0xff]
  %v52 = vld [vmem:[%s1 + $0x128] sm:$0xff]
  %v53 = vld [vmem:[%s1 + $0x130] sm:$0xff]
  %v54 = vld [vmem:[%s1 + $0x138] sm:$0xff]
  %v55 = vld [vmem:[%s1 + $0x140] sm:$0xff]
  %v56 = vld [vmem:[%s1 + $0x148] sm:$0xff]
  %v57 = vld [vmem:[%s1 + $0x150] sm:$0xff]
  %v58 = vld [vmem:[%s1 + $0x158] sm:$0xff]
  %v59 = vld [vmem:[%s1 + $0x160] sm:$0xff]
  %v60 = vld [vmem:[%s1 + $0x168] sm:$0xff]
  %v61 = vld [vmem:[%s1 + $0x170] sm:$0xff]
  %v62 = vld [vmem:[%s1 + $0x178] sm:$0xff]
  %v63 = vld [vmem:[%s1 + $0x180] sm:$0xff]
  %v64 = vld [vmem:[%s1 + $0x188] sm:$0xff]
  %v65 = vld [vmem:[%s1 + $0x190] sm:$0xff]
  %v66 = vld [vmem:[%s1 + $0x198] sm:$0xff]
  %v67 = vld [vmem:[%s1 + $0x1a0] sm:$0xff]
  %v68 = vld [vmem:[%s1 + $0x1a8] sm:$0xff]
  %v69 = vld [vmem:[%s1 + $0x1b0] sm:$0xff]
  %v70 = vld [vmem:[%s1 + $0x1b8] sm:$0xff]
  %v71 = vld [vmem:[%s1 + $0x1c0] sm:$0xff]
  %v72 = vld [vmem:[%s1 + $0x1c8] sm:$0xff]
  %v73 = vld [vmem:[%s1 + $0x1d0] sm:$0xff]
  %v74 = vld [vmem:[%s1 + $0x1d8] sm:$0xff]
  %v75 = vld [vmem:[%s1 + $0x1e0] sm:$0xff]
  %v76 = vld [vmem:[%s1 + $0x1e8] sm:$0xff]
  %v77 = vld [vmem:[%s1 + $0x1f0] sm:$0xff]
  %v78 = vld [vmem:[%s1 + $0x1f8] sm:$0xff]
  %v79 = vld [vmem:[%s1 + $0x200] sm:$0xff]
  %v80 = vld [vmem:[%s1 + $0x208] sm:$0xff]
  %v81 = vld [vmem:[%s1 + $0x210] sm:$0xff]
  %v82 = vld [vmem:[%s1 + $0x218] sm:$0xff]
  %v83 = vld [vmem:[%s1 + $0x220] sm:$0xff]
  %v84 = vld [vmem:[%s1 + $0x228] sm:$0xff]
  %v85 = vld [vmem:[%s1 + $0x230] sm:$0xff]
  %v86 = vld [vmem:[%s1 + $0x238] sm:$0xff]
  %v87 = vld [vmem:[%s1 + $0x240] sm:$0xff]
  %v88 = vld [vmem:[%s1 + $0x248] sm:$0xff]
  %v89 = vld [vmem:[%s1 + $0x250] sm:$0xff]
  %v90 = vld [vmem:[%s1 + $0x258] sm:$0xff]
  %v91 = vld [vmem:[%s1 + $0x260] sm:$0xff]
  %v92 = vld [vmem:[%s1 + $0x268] sm:$0xff]
  %v93 = vld [vmem:[%s1 + $0x270] sm:$0xff]
  %v94 = vld [vmem:[%s1 + $0x278] sm:$0xff]
  %v95 = vld [vmem:[%s1 + $0x280] sm:$0xff]
  %v96 = vld [vmem:[%s1 + $0x288] sm:$0xff]
  %v97 = vld [vmem:[%s1 + $0x290] sm:$0xff]
  %v98 = vld [vmem:[%s1 + $0x298] sm:$0xff]
  %v99 = vld [vmem:[%s1 + $0x2a0] sm:$0xff]
  %v100 = vld [vmem:[%s1 + $0x2a8] sm:$0xff]
  %v101 = vld [vmem:[%s1 + $0x2b0] sm:$0xff]
  %v102 = vld [vmem:[%s1 + $0x2b8] sm:$0xff]
  %v103 = vld [vmem:[%s1 + $0x2c0] sm:$0xff]
  %v104 = vld [vmem:[%s1 + $0x2c8] sm:$0xff]
  %v105 = vld [vmem:[%s1 + $0x2d0] sm:$0xff]
  %v106 = vld [vmem:[%s1 + $0x2d8] sm:$0xff]
  %v107 = vld [vmem:[%s1 + $0x2e0] sm:$0xff]
  %v108 = vld [vmem:[%s1 + $0x2e8] sm:$0xff]
  %v109 = vld [vmem:[%s1 + $0x2f0] sm:$0xff]
  %v110 = vld [vmem:[%s1 + $0x2f8] sm:$0xff]
  %v111 = vld [vmem:[%s1 + $0x300] sm:$0xff]
  %v112 = vld [vmem:[%s1 + $0x308] sm:$0xff]
  %v113 = vld [vmem:[%s1 + $0x310] sm:$0xff]
  %v114 = vld [vmem:[%s1 + $0x318] sm:$0xff]
  %v115 = vld [vmem:[%s1 + $0x320] sm:$0xff]
  %v116 = vld [vmem:[%s1 + $0x328] sm:$0xff]
  %v117 = vld [vmem:[%s1 + $0x330] sm:$0xff]
  %v118 = vld [vmem:[%s1 + $0x338] sm:$0xff]
  %v119 = vld [vmem:[%s1 + $0x340] sm:$0xff]
  %v120 = vld [vmem:[%s1 + $0x348] sm:$0xff]
  %v121 = vld [vmem:[%s1 + $0x350] sm:$0xff]
  %v122 = vld [vmem:[%s1 + $0x358] sm:$0xff]
  %v123 = vld [vmem:[%s1 + $0x360] sm:$0xff]
  %v124 = vld [vmem:[%s1 + $0x368] sm:$0xff]
  %v125 = vld [vmem:[%s1 + $0x370] sm:$0xff]
  %v126 = vld [vmem:[%s1 + $0x378] sm:$0xff]
  %v127 = vld [vmem:[%s1 + $0x380] sm:$0xff]
  %v128 = vld [vmem:[%s1 + $0x388] sm:$0xff]
  %v129 = vld [vmem:[%s1 + $0x390] sm:$0xff]
  %v130 = vld [vmem:[%s1 + $0x398] sm:$0xff]
  %v131 = vld [vmem:[%s1 + $0x3a0] sm:$0xff]
  %v132 = vld [vmem:[%s1 + $0x3a8] sm:$0xff]
  %v133 = vld [vmem:[%s1 + $0x3b0] sm:$0xff]
  %v134 = vld [vmem:[%s1 + $0x3b8] sm:$0xff]
  %v135 = vld [vmem:[%s1 + $0x3c0] sm:$0xff]
  %v136 = vld [vmem:[%s1 + $0x3c8] sm:$0xff]
  %v137 = vld [vmem:[%s1 + $0x3d0] sm:$0xff]
  %v138 = vld [vmem:[%s1 + $0x3d8] sm:$0xff]
  %v139 = vld [vmem:[%s1 + $0x3e0] sm:$0xff]
  %v140 = vld [vmem:[%s1 + $0x3e8] sm:$0xff]
  %v141 = vld [vmem:[%s1 + $0x3f0] sm:$0xff]
  %v142 = vld [vmem:[%s1 + $0x3f8] sm:$0xff]
  %v143 = vld [vmem:[%s2] sm:$0xff]
  %v145 = vlaneseq
  %v146 = vshrl.u32 %v145, 7
  %v147 = vsub.s32 0, %v146
  %v148 = vrot.slane %v143, %v147
  %v149 = vlaneseq
  %v150 = vshrl.u32 %v149, 7
  %v151 = vsub.s32 1, %v150
  %v152 = vrot.slane %v143, %v151
  %v153 = vlaneseq
  %v154 = vshrl.u32 %v153, 7
  %v155 = vsub.s32 2, %v154
  %v156 = vrot.slane %v143, %v155
  %v157 = vlaneseq
  %v158 = vshrl.u32 %v157, 7
  %v159 = vsub.s32 3, %v158
  %v160 = vrot.slane %v143, %v159
  %v161 = vlaneseq
  %v162 = vshrl.u32 %v161, 7
  %v163 = vsub.s32 4, %v162
  %v164 = vrot.slane %v143, %v163
  %v165 = vlaneseq
  %v166 = vshrl.u32 %v165, 7
  %v167 = vsub.s32 5, %v166
  %v168 = vrot.slane %v143, %v167
  %v169 = vlaneseq
  %v170 = vshrl.u32 %v169, 7
  %v171 = vsub.s32 6, %v170
  %v172 = vrot.slane %v143, %v171
  %v173 = vlaneseq
  %v174 = vshrl.u32 %v173, 7
  %v175 = vsub.s32 7, %v174
  %v176 = vrot.slane %v143, %v175
  %185 = vmatprep.subr.mxu0 %v136
  %186 = vmatpush1.msra.mxu0 %v135
  %187 = vmatprep.subr.mxu0 %v128
  %188 = vmatpush1.msra.mxu0 %v127
  %189 = vmatprep.subr.mxu0 %v120
  %190 = vmatpush1.msra.mxu0 %v119
  %191 = vmatprep.subr.mxu0 %v112
  %192 = vmatpush1.msra.mxu0 %v111
  %193 = vmatprep.subr.mxu0 %v104
  %194 = vmatpush1.msra.mxu0 %v103
  %195 = vmatprep.subr.mxu0 %v96
  %196 = vmatpush1.msra.mxu0 %v95
  %197 = vmatprep.subr.mxu0 %v88
  %198 = vmatpush1.msra.mxu0 %v87
  %199 = vmatprep.subr.mxu0 %v80
  %200 = vmatpush1.msra.mxu0 %v79
  %201 = vmatprep.subr.mxu0 %v72
  %202 = vmatpush1.msra.mxu0 %v71
  %203 = vmatprep.subr.mxu0 %v64
  %204 = vmatpush1.msra.mxu0 %v63
  %205 = vmatprep.subr.mxu0 %v56
  %206 = vmatpush1.msra.mxu0 %v55
  %207 = vmatprep.subr.mxu0 %v48
  %208 = vmatpush1.msra.mxu0 %v47
  %209 = vmatprep.subr.mxu0 %v40
  %210 = vmatpush1.msra.mxu0 %v39
  %211 = vmatprep.subr.mxu0 %v32
  %212 = vmatpush1.msra.mxu0 %v31
  %213 = vmatprep.subr.mxu0 %v24
  %214 = vmatpush1.msra.mxu0 %v23
  %215 = vmatprep.subr.mxu0 %v16
  %216 = vmatpush1.msra.mxu0 %v15
  %217 = vmatprep.subr.mxu0 0.0
  %218 = vmatpush2.msra.mxu0 0.0
  %219 = vmatprep.subr.mxu0 0.0
  %220 = vmatpush2.msra.mxu0 0.0
  %221 = vmatprep.subr.mxu0 0.0
  %222 = vmatpush2.msra.mxu0 0.0
  %223 = vmatprep.subr.mxu0 0.0
  %224 = vmatpush2.msra.mxu0 0.0
  %225 = vmatprep.subr.mxu0 0.0
  %226 = vmatpush2.msra.mxu0 0.0
  %227 = vmatprep.subr.mxu0 0.0
  %228 = vmatpush2.msra.mxu0 0.0
  %229 = vmatprep.subr.mxu0 0.0
  %230 = vmatpush2.msra.mxu0 0.0
  %231 = vmatprep.subr.mxu0 0.0
  %232 = vmatpush2.msra.mxu0 0.0
  %233 = vmatprep.subr.mxu0 0.0
  %234 = vmatpush2.msra.mxu0 0.0
  %235 = vmatprep.subr.mxu0 0.0
  %236 = vmatpush2.msra.mxu0 0.0
  %237 = vmatprep.subr.mxu0 0.0
  %238 = vmatpush2.msra.mxu0 0.0
  %239 = vmatprep.subr.mxu0 0.0
  %240 = vmatpush2.msra.mxu0 0.0
  %241 = vmatprep.subr.mxu0 0.0
  %242 = vmatpush2.msra.mxu0 0.0
  %243 = vmatprep.subr.mxu0 0.0
  %244 = vmatpush2.msra.mxu0 0.0
  %245 = vmatprep.subr.mxu0 0.0
  %246 = vmatpush2.msra.mxu0 0.0
  %247 = vmatprep.subr.mxu0 0.0
  %248 = vmatpush2.msra.mxu0 0.0
  %249 = vmatprep.mubr.f32.mxu0 0.0
  %250 = vmatmul.mubr.f32.gmra.mxu0 %v14
  %v251 = vpop.f32.mrf.mxu0
  %v252 = vadd.f32 %v148, %v251
  %v253 = vpop.f32.mrf.mxu0
  %v254 = vadd.f32 %v152, %v253
  %255 = vdwg.mxu0
  %256 = vmatprep.subr.mxu0 %v138
  %257 = vmatpush1.msra.mxu0 %v137
  %258 = vmatprep.subr.mxu0 %v130
  %259 = vmatpush1.msra.mxu0 %v129
  %260 = vmatprep.subr.mxu0 %v122
  %261 = vmatpush1.msra.mxu0 %v121
  %262 = vmatprep.subr.mxu0 %v114
  %263 = vmatpush1.msra.mxu0 %v113
  %264 = vmatprep.subr.mxu0 %v106
  %265 = vmatpush1.msra.mxu0 %v105
  %266 = vmatprep.subr.mxu0 %v98
  %267 = vmatpush1.msra.mxu0 %v97
  %268 = vmatprep.subr.mxu0 %v90
  %269 = vmatpush1.msra.mxu0 %v89
  %270 = vmatprep.subr.mxu0 %v82
  %271 = vmatpush1.msra.mxu0 %v81
  %272 = vmatprep.subr.mxu0 %v74
  %273 = vmatpush1.msra.mxu0 %v73
  %274 = vmatprep.subr.mxu0 %v66
  %275 = vmatpush1.msra.mxu0 %v65
  %276 = vmatprep.subr.mxu0 %v58
  %277 = vmatpush1.msra.mxu0 %v57
  %278 = vmatprep.subr.mxu0 %v50
  %279 = vmatpush1.msra.mxu0 %v49
  %280 = vmatprep.subr.mxu0 %v42
  %281 = vmatpush1.msra.mxu0 %v41
  %282 = vmatprep.subr.mxu0 %v34
  %283 = vmatpush1.msra.mxu0 %v33
  %284 = vmatprep.subr.mxu0 %v26
  %285 = vmatpush1.msra.mxu0 %v25
  %286 = vmatprep.subr.mxu0 %v18
  %287 = vmatpush1.msra.mxu0 %v17
  %288 = vmatprep.subr.mxu0 0.0
  %289 = vmatpush2.msra.mxu0 0.0
  %290 = vmatprep.subr.mxu0 0.0
  %291 = vmatpush2.msra.mxu0 0.0
  %292 = vmatprep.subr.mxu0 0.0
  %293 = vmatpush2.msra.mxu0 0.0
  %294 = vmatprep.subr.mxu0 0.0
  %295 = vmatpush2.msra.mxu0 0.0
  %296 = vmatprep.subr.mxu0 0.0
  %297 = vmatpush2.msra.mxu0 0.0
  %298 = vmatprep.subr.mxu0 0.0
  %299 = vmatpush2.msra.mxu0 0.0
  %300 = vmatprep.subr.mxu0 0.0
  %301 = vmatpush2.msra.mxu0 0.0
  %302 = vmatprep.subr.mxu0 0.0
  %303 = vmatpush2.msra.mxu0 0.0
  %304 = vmatprep.subr.mxu0 0.0
  %305 = vmatpush2.msra.mxu0 0.0
  %306 = vmatprep.subr.mxu0 0.0
  %307 = vmatpush2.msra.mxu0 0.0
  %308 = vmatprep.subr.mxu0 0.0
  %309 = vmatpush2.msra.mxu0 0.0
  %310 = vmatprep.subr.mxu0 0.0
  %311 = vmatpush2.msra.mxu0 0.0
  %312 = vmatprep.subr.mxu0 0.0
  %313 = vmatpush2.msra.mxu0 0.0
  %314 = vmatprep.subr.mxu0 0.0
  %315 = vmatpush2.msra.mxu0 0.0
  %316 = vmatprep.subr.mxu0 0.0
  %317 = vmatpush2.msra.mxu0 0.0
  %318 = vmatprep.subr.mxu0 0.0
  %319 = vmatpush2.msra.mxu0 0.0
  %320 = vmatprep.mubr.f32.mxu0 0.0
  %321 = vmatmul.mubr.f32.gmra.mxu0 %v14
  %v322 = vpop.f32.mrf.mxu0
  %v323 = vadd.f32 %v156, %v322
  %v324 = vpop.f32.mrf.mxu0
  %v325 = vadd.f32 %v160, %v324
  %326 = vdwg.mxu0
  %327 = vmatprep.subr.mxu0 %v140
  %328 = vmatpush1.msra.mxu0 %v139
  %329 = vmatprep.subr.mxu0 %v132
  %330 = vmatpush1.msra.mxu0 %v131
  %331 = vmatprep.subr.mxu0 %v124
  %332 = vmatpush1.msra.mxu0 %v123
  %333 = vmatprep.subr.mxu0 %v116
  %334 = vmatpush1.msra.mxu0 %v115
  %335 = vmatprep.subr.mxu0 %v108
  %336 = vmatpush1.msra.mxu0 %v107
  %337 = vmatprep.subr.mxu0 %v100
  %338 = vmatpush1.msra.mxu0 %v99
  %339 = vmatprep.subr.mxu0 %v92
  %340 = vmatpush1.msra.mxu0 %v91
  %341 = vmatprep.subr.mxu0 %v84
  %342 = vmatpush1.msra.mxu0 %v83
  %343 = vmatprep.subr.mxu0 %v76
  %344 = vmatpush1.msra.mxu0 %v75
  %345 = vmatprep.subr.mxu0 %v68
  %346 = vmatpush1.msra.mxu0 %v67
  %347 = vmatprep.subr.mxu0 %v60
  %348 = vmatpush1.msra.mxu0 %v59
  %349 = vmatprep.subr.mxu0 %v52
  %350 = vmatpush1.msra.mxu0 %v51
  %351 = vmatprep.subr.mxu0 %v44
  %352 = vmatpush1.msra.mxu0 %v43
  %353 = vmatprep.subr.mxu0 %v36
  %354 = vmatpush1.msra.mxu0 %v35
  %355 = vmatprep.subr.mxu0 %v28
  %356 = vmatpush1.msra.mxu0 %v27
  %357 = vmatprep.subr.mxu0 %v20
  %358 = vmatpush1.msra.mxu0 %v19
  %359 = vmatprep.subr.mxu0 0.0
  %360 = vmatpush2.msra.mxu0 0.0
  %361 = vmatprep.subr.mxu0 0.0
  %362 = vmatpush2.msra.mxu0 0.0
  %363 = vmatprep.subr.mxu0 0.0
  %364 = vmatpush2.msra.mxu0 0.0
  %365 = vmatprep.subr.mxu0 0.0
  %366 = vmatpush2.msra.mxu0 0.0
  %367 = vmatprep.subr.mxu0 0.0
  %368 = vmatpush2.msra.mxu0 0.0
  %369 = vmatprep.subr.mxu0 0.0
  %370 = vmatpush2.msra.mxu0 0.0
  %371 = vmatprep.subr.mxu0 0.0
  %372 = vmatpush2.msra.mxu0 0.0
  %373 = vmatprep.subr.mxu0 0.0
  %374 = vmatpush2.msra.mxu0 0.0
  %375 = vmatprep.subr.mxu0 0.0
  %376 = vmatpush2.msra.mxu0 0.0
  %377 = vmatprep.subr.mxu0 0.0
  %378 = vmatpush2.msra.mxu0 0.0
  %379 = vmatprep.subr.mxu0 0.0
  %380 = vmatpush2.msra.mxu0 0.0
  %381 = vmatprep.subr.mxu0 0.0
  %382 = vmatpush2.msra.mxu0 0.0
  %383 = vmatprep.subr.mxu0 0.0
  %384 = vmatpush2.msra.mxu0 0.0
  %385 = vmatprep.subr.mxu0 0.0
  %386 = vmatpush2.msra.mxu0 0.0
  %387 = vmatprep.subr.mxu0 0.0
  %388 = vmatpush2.msra.mxu0 0.0
  %389 = vmatprep.subr.mxu0 0.0
  %390 = vmatpush2.msra.mxu0 0.0
  %391 = vmatprep.mubr.f32.mxu0 0.0
  %392 = vmatmul.mubr.f32.gmra.mxu0 %v14
  %v393 = vpop.f32.mrf.mxu0
  %v394 = vadd.f32 %v164, %v393
  %v395 = vpop.f32.mrf.mxu0
  %v396 = vadd.f32 %v168, %v395
  %397 = vdwg.mxu0
  %398 = vmatprep.subr.mxu0 %v142
  %399 = vmatpush1.msra.mxu0 %v141
  %400 = vmatprep.subr.mxu0 %v134
  %401 = vmatpush1.msra.mxu0 %v133
  %402 = vmatprep.subr.mxu0 %v126
  %403 = vmatpush1.msra.mxu0 %v125
  %404 = vmatprep.subr.mxu0 %v118
  %405 = vmatpush1.msra.mxu0 %v117
  %406 = vmatprep.subr.mxu0 %v110
  %407 = vmatpush1.msra.mxu0 %v109
  %408 = vmatprep.subr.mxu0 %v102
  %409 = vmatpush1.msra.mxu0 %v101
  %410 = vmatprep.subr.mxu0 %v94
  %411 = vmatpush1.msra.mxu0 %v93
  %412 = vmatprep.subr.mxu0 %v86
  %413 = vmatpush1.msra.mxu0 %v85
  %414 = vmatprep.subr.mxu0 %v78
  %415 = vmatpush1.msra.mxu0 %v77
  %416 = vmatprep.subr.mxu0 %v70
  %417 = vmatpush1.msra.mxu0 %v69
  %418 = vmatprep.subr.mxu0 %v62
  %419 = vmatpush1.msra.mxu0 %v61
  %420 = vmatprep.subr.mxu0 %v54
  %421 = vmatpush1.msra.mxu0 %v53
  %422 = vmatprep.subr.mxu0 %v46
  %423 = vmatpush1.msra.mxu0 %v45
  %424 = vmatprep.subr.mxu0 %v38
  %425 = vmatpush1.msra.mxu0 %v37
  %426 = vmatprep.subr.mxu0 %v30
  %427 = vmatpush1.msra.mxu0 %v29
  %428 = vmatprep.subr.mxu0 %v22
  %429 = vmatpush1.msra.mxu0 %v21
  %430 = vmatprep.subr.mxu0 0.0
  %431 = vmatpush2.msra.mxu0 0.0
  %432 = vmatprep.subr.mxu0 0.0
  %433 = vmatpush2.msra.mxu0 0.0
  %434 = vmatprep.subr.mxu0 0.0
  %435 = vmatpush2.msra.mxu0 0.0
  %436 = vmatprep.subr.mxu0 0.0
  %437 = vmatpush2.msra.mxu0 0.0
  %438 = vmatprep.subr.mxu0 0.0
  %439 = vmatpush2.msra.mxu0 0.0
  %440 = vmatprep.subr.mxu0 0.0
  %441 = vmatpush2.msra.mxu0 0.0
  %442 = vmatprep.subr.mxu0 0.0
  %443 = vmatpush2.msra.mxu0 0.0
  %444 = vmatprep.subr.mxu0 0.0
  %445 = vmatpush2.msra.mxu0 0.0
  %446 = vmatprep.subr.mxu0 0.0
  %447 = vmatpush2.msra.mxu0 0.0
  %448 = vmatprep.subr.mxu0 0.0
  %449 = vmatpush2.msra.mxu0 0.0
  %450 = vmatprep.subr.mxu0 0.0
  %451 = vmatpush2.msra.mxu0 0.0
  %452 = vmatprep.subr.mxu0 0.0
  %453 = vmatpush2.msra.mxu0 0.0
  %454 = vmatprep.subr.mxu0 0.0
  %455 = vmatpush2.msra.mxu0 0.0
  %456 = vmatprep.subr.mxu0 0.0
  %457 = vmatpush2.msra.mxu0 0.0
  %458 = vmatprep.subr.mxu0 0.0
  %459 = vmatpush2.msra.mxu0 0.0
  %460 = vmatprep.subr.mxu0 0.0
  %461 = vmatpush2.msra.mxu0 0.0
  %462 = vmatprep.mubr.f32.mxu0 0.0
  %463 = vmatmul.mubr.f32.gmra.mxu0 %v14
  %v464 = vpop.f32.mrf.mxu0
  %v465 = vadd.f32 %v172, %v464
  %v466 = vpop.f32.mrf.mxu0
  %v467 = vadd.f32 %v176, %v466
  %468 = vdwg.mxu0
  %v477 = vcombine.low %v252, %v254
  %v478 = vcombine.low %v323, %v325
  %v479 = vcombine.low %v394, %v396
  %v480 = vcombine.low %v465, %v467
  %v482 = vunpack.c.l.s4 1966171168
  %v483 = vunpack.c.0.s8 %v482
  %v484 = vlaneseq
  %v485 = vshrl.u32 %v484, 7
  %v486 = vsub.s32 %v483, %v485
  %v487 = vrot.slane %v477, %v486
  %v489 = vunpack.c.l.s4 1966171168
  %v490 = vunpack.c.0.s8 %v489
  %v491 = vlaneseq
  %v492 = vshrl.u32 %v491, 7
  %v493 = vsub.s32 %v490, %v492
  %v494 = vrot.slane %v478, %v493
  %v496 = vunpack.c.l.s4 1966171168
  %v497 = vunpack.c.0.s8 %v496
  %v498 = vlaneseq
  %v499 = vshrl.u32 %v498, 7
  %v500 = vsub.s32 %v497, %v499
  %v501 = vrot.slane %v479, %v500
  %v503 = vunpack.c.l.s4 1966171168
  %v504 = vunpack.c.0.s8 %v503
  %v505 = vlaneseq
  %v506 = vshrl.u32 %v505, 7
  %v507 = vsub.s32 %v504, %v506
  %v508 = vrot.slane %v480, %v507
  %v509 = vcombine.low %v487, %v494
  %v510 = vcombine.low %v501, %v508
  %v512 = vunpack.c.l.s4 1966171168
  %v513 = vunpack.c.0.s8 %v512
  %v514 = vlaneseq
  %v515 = vshrl.u32 %v514, 7
  %v516 = vsub.s32 %v513, %v515
  %v517 = vrot.slane %v509, %v516
  %v519 = vunpack.c.l.s4 1966171168
  %v520 = vunpack.c.0.s8 %v519
  %v521 = vlaneseq
  %v522 = vshrl.u32 %v521, 7
  %v523 = vsub.s32 %v520, %v522
  %v524 = vrot.slane %v510, %v523
  %v525 = vcombine.low %v517, %v524
  %527 = vst [vmem:[%s3] sm:$0xff] %v525
  // Predicated region
  $region14: #{cell_conv.1} parent=0 // pred_check
    _
  $region15: #{cell_conv.1} parent=0 // pred_check_branch
    %529 = sbr.rel (0) target = $region17
  $region16: #{cell_conv.1} parent=0 // pred_region
    _
  $region17: #{cell_conv.1} parent=0 // pred_fallthru
    _
  // Predicated region
  $region18: #{cell_conv.1} parent=0 // pred_check
    _
  $region19: #{cell_conv.1} parent=0 // pred_check_branch
    %531 = sbr.rel (0) target = $region21
  $region20: #{cell_conv.1} parent=0 // pred_region
    _
  $region21: #{cell_conv.1} parent=0 // pred_fallthru
    _

</llo_original>
